<compile_context>
chip_gen: v5e
topology: v5e:2x2
jax: 0.10.0
libtpu: 0.0.40
codegen_flags: <defaults>
</compile_context>

<pallas_src>
import functools
import math

import jax
import jax.numpy as jnp
from jax.experimental import pallas as pl
from jax.experimental.pallas import tpu as pltpu


# ----------------------------- Pallas kernel ---------------------------------
def _conv_tap_kernel(w_ref, x_ref, b_ref, o_ref, acc_ref, *, add_bias):
    """One (batch, length-tile) output block; grid axis 2 runs over the K taps.

    w_ref:   (Cout, Cin)  weight slice for the current tap
    x_ref:   (Cin,  tl)   strided input window for the current tap
    b_ref:   (Cout, 1)    bias
    o_ref:   (Cout, tl)   output block (written on the last tap only)
    acc_ref: (Cout, tl)   f32 VMEM accumulator scratch
    """
    k = pl.program_id(2)

    @pl.when(k == 0)
    def _():
        acc_ref[...] = jnp.zeros_like(acc_ref)

    acc_ref[...] += jnp.dot(w_ref[...], x_ref[...],
                            preferred_element_type=jnp.float32)

    @pl.when(k == pl.num_programs(2) - 1)
    def _():
        out = acc_ref[...]
        if add_bias:
            out = out + b_ref[...]
        o_ref[...] = out.astype(o_ref.dtype)


# ------------------------------ wrapper ---------------------------------------
def _conv1d_pallas(x, weight, bias, *, stride, padding, dilation, add_bias,
                   compute_dtype=jnp.float32):
    """Conv1d with PyTorch semantics. x: (N, Cin, L), weight: (Cout, Cin, K)."""
    N, Cin, L = x.shape
    Cout, _, K = weight.shape
    S, P, D = stride, padding, dilation
    out_dtype = x.dtype

    L_out = (L + 2 * P - D * (K - 1) - 1) // S + 1
    assert L_out >= 1, "invalid conv configuration (empty output)"

    # Length tiling: lane dimension is the output length, padded to a multiple
    # of 128 (small L_out) or tiled in 512-wide chunks (large L_out).
    LANE = 128
    if L_out <= 512:
        tl = -(-L_out // LANE) * LANE
    else:
        tl = 512
    L_out_pad = -(-L_out // tl) * tl
    n_lt = L_out_pad // tl

    # Pad the length axis so every tap's strided view stays in bounds; the
    # extra (zero) columns produce garbage output rows that get sliced off.
    needed = (L_out_pad - 1) * S + (K - 1) * D + 1
    right_extra = max(0, needed - (L + 2 * P))
    x_pad = jnp.pad(x, ((0, 0), (0, 0), (P, P + right_extra)))

    # Per-tap strided views: x_taps[k, n, c, l] = x_pad[n, c, l*S + k*D].
    # For the default kernel_size=1 this is just one (strided) slice.
    # TODO(synk): for K > 1 this materializes K shifted copies of x in HBM; a
    # fully fused version would keep x in pl.ANY and DMA overlapping windows
    # inside the kernel.
    taps = []
    for k in range(K):
        taps.append(jax.lax.slice(
            x_pad,
            (0, 0, k * D),
            (N, Cin, k * D + (L_out_pad - 1) * S + 1),
            (1, 1, S)))
    x_taps = jnp.stack(taps, axis=0).astype(compute_dtype)      # (K, N, Cin, Lp)
    w_taps = jnp.transpose(weight, (2, 0, 1)).astype(compute_dtype)  # (K, Cout, Cin)
    b2 = bias.reshape(Cout, 1).astype(jnp.float32)

    kernel = functools.partial(_conv_tap_kernel, add_bias=add_bias)

    in_itemsize = jax.dtypes.canonicalize_dtype(compute_dtype).itemsize
    out_itemsize = jax.dtypes.canonicalize_dtype(out_dtype).itemsize
    cost = pl.CostEstimate(
        flops=2 * N * L_out_pad * Cout * Cin * K,
        transcendentals=0,
        bytes_accessed=(K * N * Cin * L_out_pad * in_itemsize
                        + K * Cout * Cin * in_itemsize
                        + Cout * 4
                        + N * Cout * L_out_pad * out_itemsize))

    y_pad = pl.pallas_call(
        kernel,
        out_shape=jax.ShapeDtypeStruct((N, Cout, L_out_pad), out_dtype),
        grid_spec=pltpu.PrefetchScalarGridSpec(
            num_scalar_prefetch=0,
            grid=(N, n_lt, K),                      # reduction (taps) last
            in_specs=[
                # weight tap: (Cout, Cin)
                pl.BlockSpec((None, Cout, Cin), lambda n, lt, k: (k, 0, 0)),
                # input tap window: (Cin, tl)
                pl.BlockSpec((None, None, Cin, tl),
                             lambda n, lt, k: (k, n, 0, lt)),
                # bias: (Cout, 1), independent of the grid
                pl.BlockSpec((Cout, 1), lambda n, lt, k: (0, 0)),
            ],
            out_specs=pl.BlockSpec((None, Cout, tl),
                                   lambda n, lt, k: (n, 0, lt)),
            scratch_shapes=[pltpu.VMEM((Cout, tl), jnp.float32)],
        ),
        compiler_params=pltpu.CompilerParams(
            dimension_semantics=("parallel", "parallel", "arbitrary"),
            vmem_limit_bytes=64 * 1024 * 1024,
        ),
        cost_estimate=cost,
    )(w_taps, x_taps, b2)

    return y_pad[:, :, :L_out]


# ------------------------------- Module ---------------------------------------
class Convolution:
    """JAX/Pallas equivalent of the PyTorch Convolution (Conv1d) module."""

    def __init__(self, in_channels, out_channels, kernel_size=1, stride=1,
                 padding=0, dilation=1, bias=True, w_init='linear', key=None,
                 compute_dtype=jnp.float32):
        self.in_channels = in_channels
        self.out_channels = out_channels
        self.kernel_size = kernel_size
        self.stride = stride
        self.padding = padding
        self.dilation = dilation
        self.use_bias = bias
        self.compute_dtype = compute_dtype   # jnp.bfloat16 for full MXU rate

        if key is None:
            key = jax.random.PRNGKey(0)
        k_w, k_b = jax.random.split(key)

        # xavier_uniform_ with gain for 'linear' == 1.0
        gain = 1.0
        fan_in = in_channels * kernel_size
        fan_out = out_channels * kernel_size
        limit = gain * math.sqrt(6.0 / (fan_in + fan_out))
        # weight shape matches nn.Conv1d: (out_channels, in_channels, kernel_size)
        self.weight = jax.random.uniform(
            k_w, (out_channels, in_channels, kernel_size),
            minval=-limit, maxval=limit, dtype=jnp.float32)

        if bias:
            # PyTorch Conv1d default bias init: U(-1/sqrt(fan_in), 1/sqrt(fan_in))
            b_lim = 1.0 / math.sqrt(fan_in)
            self.bias = jax.random.uniform(
                k_b, (out_channels,), minval=-b_lim, maxval=b_lim,
                dtype=jnp.float32)
        else:
            self.bias = jnp.zeros((out_channels,), dtype=jnp.float32)

    def __call__(self, x):
        # x: (N, C_in, L)  (PyTorch NCL layout) -> (N, C_out, L_out)
        return _conv1d_pallas(
            x, self.weight, self.bias,
            stride=self.stride, padding=self.padding, dilation=self.dilation,
            add_bias=self.use_bias, compute_dtype=self.compute_dtype)


# ------------------------------- main ----------------------------------------
if __name__ == "__main__":
    key = jax.random.PRNGKey(0)
    k_x, k_p1, k_p2 = jax.random.split(key, 3)

    # Small shapes consistent with the module: batch=2, in_channels=4, seq=16,
    # out_channels=8.
    N, Cin, L, Cout = 2, 4, 16, 8
    x = jax.random.normal(k_x, (N, Cin, L), dtype=jnp.float32)

    def conv_ref(xv, w, b, stride, padding, dilation):
        y = jax.lax.conv_general_dilated(
            xv, w, window_strides=(stride,), padding=[(padding, padding)],
            rhs_dilation=(dilation,),
            dimension_numbers=('NCH', 'OIH', 'NCH'),
            precision=jax.lax.Precision.HIGHEST)
        return y + b[None, :, None]

    # 1) default pointwise conv (kernel_size=1), f32 compute.
    conv1 = Convolution(Cin, Cout, kernel_size=1, stride=1, padding=0,
                        dilation=1, bias=True, w_init='linear', key=k_p1)
    y1 = jax.block_until_ready(conv1(x))
    r1 = conv_ref(x, conv1.weight, conv1.bias, 1, 0, 1)
    assert y1.shape == (N, Cout, L), y1.shape
    assert jnp.allclose(y1, r1, atol=1e-4, rtol=1e-4), "k=1 mismatch vs reference"

    # 2) kernel_size=3, padding=1 ("same" conv), exercises the K-tap reduction.
    conv2 = Convolution(Cin, Cout, kernel_size=3, stride=1, padding=1,
                        dilation=1, bias=True, w_init='linear', key=k_p2)
    y2 = jax.block_until_ready(conv2(x))
    r2 = conv_ref(x, conv2.weight, conv2.bias, 1, 1, 1)
    assert y2.shape == (N, Cout, L), y2.shape
    assert jnp.allclose(y2, r2, atol=1e-4, rtol=1e-4), "k=3 mismatch vs reference"

    # 3) bf16 MXU path (f32 accumulation), loose tolerance.
    conv3 = Convolution(Cin, Cout, kernel_size=1, key=k_p1,
                        compute_dtype=jnp.bfloat16)
    y3 = jax.block_until_ready(conv3(x))
    assert jnp.allclose(y3, r1, atol=5e-2, rtol=5e-2), "bf16 mismatch vs reference"

    print("KERNEL_OK")
</pallas_src>

<mosaic_0001>
module attributes {stable_mosaic.version = 11 : i64} {
  func.func @_conv_tap_kernel(%arg0: i32, %arg1: i32, %arg2: i32, %arg3: memref<1x8x4xf32, #tpu.memory_space<vmem>>, %arg4: memref<1x1x4x128xf32, #tpu.memory_space<vmem>>, %arg5: memref<8x1xf32, #tpu.memory_space<vmem>>, %arg6: memref<1x8x128xf32, #tpu.memory_space<vmem>>, %arg7: memref<8x128xf32, #tpu.memory_space<vmem>>) attributes {dimension_semantics = [#tpu.dimension_semantics<parallel>, #tpu.dimension_semantics<parallel>, #tpu.dimension_semantics<arbitrary>], iteration_bounds = array<i64: 2, 1, 1>, scalar_prefetch = 0 : i64, scratch_operands = 1 : i64, tpu.core_type = #tpu.core_type<tc>, window_params = [{transform_indices = @transform_0, window_bounds = array<i64: 1, 8, 4>}, {transform_indices = @transform_1, window_bounds = array<i64: 1, 1, 4, 128>}, {pipeline_mode = #tpu.pipeline_mode<synchronous>, transform_indices = @transform_2, window_bounds = array<i64: 8, 1>}, {transform_indices = @transform_3, window_bounds = array<i64: 1, 8, 128>}]} {
    %c0_i32 = arith.constant 0 : i32
    %0 = arith.cmpi eq, %arg2, %c0_i32 : i32
    %1 = arith.extui %0 : i1 to i32
    %c0_i32_0 = arith.constant 0 : i32
    %2 = arith.cmpi ne, %1, %c0_i32_0 : i32
    scf.if %2 {
      %cst_13 = arith.constant 0.000000e+00 : f32
      %14 = vector.broadcast %cst_13 : f32 to vector<8x128xf32>
      %c0_14 = arith.constant 0 : index
      %c0_15 = arith.constant 0 : index
      %15 = vector.load %arg7[%c0_14, %c0_15] : memref<8x128xf32, #tpu.memory_space<vmem>>, vector<8x128xf32>
      tpu.vector_store %arg7[%c0_14, %c0_15], %14 {strides = array<i32>} : memref<8x128xf32, #tpu.memory_space<vmem>>, vector<8x128xf32>,
    } else {
    }
    %c0 = arith.constant 0 : index
    %c0_1 = arith.constant 0 : index
    %3 = vector.load %arg7[%c0, %c0_1] : memref<8x128xf32, #tpu.memory_space<vmem>>, vector<8x128xf32>
    %c0_2 = arith.constant 0 : index
    %c0_3 = arith.constant 0 : index
    %c0_4 = arith.constant 0 : index
    %4 = vector.load %arg3[%c0_2, %c0_3, %c0_4] : memref<1x8x4xf32, #tpu.memory_space<vmem>>, vector<1x8x4xf32>
    %5 = vector.shape_cast %4 : vector<1x8x4xf32> to vector<8x4xf32>
    %c0_5 = arith.constant 0 : index
    %c0_6 = arith.constant 0 : index
    %c0_7 = arith.constant 0 : index
    %c0_8 = arith.constant 0 : index
    %6 = vector.load %arg4[%c0_5, %c0_6, %c0_7, %c0_8] : memref<1x1x4x128xf32, #tpu.memory_space<vmem>>, vector<1x1x4x128xf32>
    %7 = vector.shape_cast %6 : vector<1x1x4x128xf32> to vector<4x128xf32>
    %cst = arith.constant dense<0.000000e+00> : vector<8x128xf32>
    %8 = tpu.matmul %5, %7, %cst {dimension_numbers = #tpu.dot_dimension_numbers<[1], [0], [0], [1], [0, 0, 1, 1], [], []>} : vector<8x4xf32>, vector<4x128xf32>, vector<8x128xf32> -> vector<8x128xf32>
    %9 = arith.addf %3, %8 : vector<8x128xf32>
    %c0_9 = arith.constant 0 : index
    %c0_10 = arith.constant 0 : index
    %10 = vector.load %arg7[%c0_9, %c0_10] : memref<8x128xf32, #tpu.memory_space<vmem>>, vector<8x128xf32>
    tpu.vector_store %arg7[%c0_9, %c0_10], %9 {strides = array<i32>} : memref<8x128xf32, #tpu.memory_space<vmem>>, vector<8x128xf32>,
    %c0_i32_11 = arith.constant 0 : i32
    %11 = arith.cmpi eq, %arg2, %c0_i32_11 : i32
    %12 = arith.extui %11 : i1 to i32
    %c0_i32_12 = arith.constant 0 : i32
    %13 = arith.cmpi ne, %12, %c0_i32_12 : i32
    scf.if %13 {
      %c0_13 = arith.constant 0 : index
      %c0_14 = arith.constant 0 : index
      %14 = vector.load %arg7[%c0_13, %c0_14] : memref<8x128xf32, #tpu.memory_space<vmem>>, vector<8x128xf32>
      %c0_15 = arith.constant 0 : index
      %c0_16 = arith.constant 0 : index
      %15 = vector.load %arg5[%c0_15, %c0_16] : memref<8x1xf32, #tpu.memory_space<vmem>>, vector<8x1xf32>
      %16 = vector.broadcast %15 : vector<8x1xf32> to vector<8x128xf32>
      %17 = arith.addf %14, %16 : vector<8x128xf32>
      %c0_17 = arith.constant 0 : index
      %c0_18 = arith.constant 0 : index
      %c0_19 = arith.constant 0 : index
      %18 = vector.load %arg6[%c0_17, %c0_18, %c0_19] : memref<1x8x128xf32, #tpu.memory_space<vmem>>, vector<1x8x128xf32>
      %19 = vector.shape_cast %18 : vector<1x8x128xf32> to vector<8x128xf32>
      %20 = vector.shape_cast %17 : vector<8x128xf32> to vector<1x8x128xf32>
      tpu.vector_store %arg6[%c0_17, %c0_18, %c0_19], %20 {strides = array<i32>} : memref<1x8x128xf32, #tpu.memory_space<vmem>>, vector<1x8x128xf32>,
    } else {
    }
    return
  }
  func.func @transform_0(%arg0: i32, %arg1: i32, %arg2: i32) -> (i32, i32, i32) {
    %c0_i32 = arith.constant 0 : i32
    %c0_i32_0 = arith.constant 0 : i32
    %c0_i32_1 = arith.constant 0 : i32
    return %arg2, %c0_i32, %c0_i32_0 : i32, i32, i32
  }
  func.func @transform_1(%arg0: i32, %arg1: i32, %arg2: i32) -> (i32, i32, i32, i32) {
    %c0_i32 = arith.constant 0 : i32
    %c0_i32_0 = arith.constant 0 : i32
    return %arg2, %arg0, %c0_i32, %arg1 : i32, i32, i32, i32
  }
  func.func @transform_2(%arg0: i32, %arg1: i32, %arg2: i32) -> (i32, i32) {
    %c0_i32 = arith.constant 0 : i32
    %c0_i32_0 = arith.constant 0 : i32
    %c0_i32_1 = arith.constant 0 : i32
    return %c0_i32, %c0_i32_0 : i32, i32
  }
  func.func @transform_3(%arg0: i32, %arg1: i32, %arg2: i32) -> (i32, i32, i32) {
    %c0_i32 = arith.constant 0 : i32
    %c0_i32_0 = arith.constant 0 : i32
    return %arg0, %c0_i32, %arg1 : i32, i32, i32
  }
}

</mosaic_0001>

<llo_original>
// kernel: tpu_custom_call.1
$region0: #{tpu_custom_call.1}
  #allocation0 [shape = 'u32[]', space=smem, size = 0x4, offset = 0x4, fixed_abs, tag = 'smem constant byte address 0x4 - core index']
  #allocation1 [shape = 'u32[72,128]{1,0:T(1,128)}', space=vmem, size = 0x9000, scoped, tag = 'internal scratch']
  #allocation2 [shape = 'f32[8,128]{1,0:T(8,128)}', space=vmem, size = 0x1000, scoped, tag = 'scratch operand']
  %s0 = inlined_call_operand.vmem [shape: f32[1,8,4], index: 0, kind: input, shape index: {}]
  %s1 = inlined_call_operand.vmem [shape: f32[1,2,4,128], index: 1, kind: input, shape index: {}]
  %s2 = inlined_call_operand.vmem [shape: f32[8,1], index: 2, kind: input, shape index: {}]
  %s3 = inlined_call_operand.hbm [shape: f32[2,8,128], index: 3, kind: output, shape index: {}]
  %s4 = sld [smem:[#allocation0]]
  $region53: #{tpu_custom_call.1} parent=0
    _
  %s6 = ssub.s32 1, %s4
  %s7 = scalar_select 0, %s6, %s4
  $region1: #{tpu_custom_call.1} parent=0
    #allocation3 [shape = 'u8[8192]{0}', space=vmem, size = 0x2000, scoped, tag = 'output window, operand 0']
    #allocation4 [shape = 's32[2]{0}', space=sflag, size = 0x8, scoped, tag = 'scoped memory for tpu_custom_call.1']
    %8 = vsyncpa [#allocation4], 0
    %s9 = scalar_lea.sflag [#allocation4], 1
    %10 = vsyncpa %s9, 0
    loop: start=0, step=1, limit=4
    $region2: #{tpu_custom_call.1} parent=1 // loop_pre_header
      _
    $region3: #{tpu_custom_call.1} parent=1 // loop_header
      %s12 = sphi 0, %s16
      %p13 = scmp.ge.s32.totalorder %s12, 4
      %s19 = sphi 0, %s38
      %s20 = sphi 0, %s34
      %s21 = sphi 0, %s30
      %s22 = sphi 0, %s19
      %s23 = sphi 0, %s20
      %s24 = sphi 0, %s21
      %s25 = sphi 0, %s22
      %s26 = sphi 0, %s23
      %s27 = sphi 0, %s24
      %s41 = sphi 0, %s43
      %s44 = sphi 0, %s41
      %s45 = sphi 0, %s44
      %s61 = sphi 0, %s45
      %s71 = sphi 0, %s73
      %s74 = sphi 0, %s71
      %s75 = sphi 0, %s74
      %s91 = sphi 0, %s75
      %s95 = sphi 0, %s95
      %s97 = sphi 0, %s95
      %s98 = sphi 0, %s97
      %s112 = sphi 0, %s98
      %s120 = sphi 0, %s122
      %s123 = sphi 0, %s120
      %s124 = sphi 0, %s123
      %s140 = sphi 0, %s124
    $region4: #{tpu_custom_call.1} parent=1 // loop_header_branch
      %15 = sbr.rel (%p13) target = $region8
    $region5: #{tpu_custom_call.1} parent=1 // loop_body
      %s17 = ssub.s32 %s12, 1
      %s18 = ssub.s32 %s12, 2
      %s28 = sadd.s32 1, %s21
      %p29 = scmp.ge.s32.totalorder %s28, 1
      %s30 = scalar_select %p29, 0, %s28
      %s31 = sadd.s32 1, %s20
      %s32 = scalar_select %p29, %s31, %s20
      %p33 = scmp.ge.s32.totalorder %s32, 1
      %s34 = scalar_select %p33, 0, %s32
      %s35 = sadd.s32 1, %s19
      %s36 = scalar_select %p33, %s35, %s19
      %p37 = scmp.ge.s32.totalorder %s36, 2
      %s38 = scalar_select %p37, 0, %s36
      %s39 = ssub.s32 %s21, %s30
      %p40 = scmp.eq.s32.totalorder %s39, 0
      %s42 = sadd.s32 %s41, 1
      %s43 = scalar_select %p40, %s41, %s42
      %p46 = pneg %p40
      %p47 = scmp.eq.s32.totalorder %s12, 1
      %p48 = por %p46, %p47
      %p49 = scmp.ne.s32.totalorder %s41, %s44
      %p50 = scmp.eq.s32.totalorder %s12, 0
      %p51 = por %p49, %p50
      %p52 = scmp.ne.s32.totalorder %s41, %s44
      %p53 = scmp.eq.s32.totalorder %s17, 1
      %p54 = por %p52, %p53
      %p55 = scmp.ne.s32.totalorder %s44, %s45
      %p56 = scmp.eq.s32.totalorder %s17, 0
      %p57 = por %p55, %p56
      %p58 = scmp.ne.s32.totalorder %s44, %s45
      %p59 = scmp.eq.s32.totalorder %s18, 1
      %p60 = por %p58, %p59
      %p62 = scmp.ne.s32.totalorder %s45, %s61
      %p63 = scmp.eq.s32.totalorder %s18, 0
      %p64 = por %p62, %p63
      %s65 = ssub.s32 %s21, %s30
      %s66 = ssub.s32 %s19, %s38
      %s67 = sor.u32 %s65, %s66
      %s68 = ssub.s32 %s20, %s34
      %s69 = sor.u32 %s67, %s68
      %p70 = scmp.eq.s32.totalorder %s69, 0
      %s72 = sadd.s32 %s71, 1
      %s73 = scalar_select %p70, %s71, %s72
      %p76 = pneg %p70
      %p77 = scmp.eq.s32.totalorder %s12, 1
      %p78 = por %p76, %p77
      %p79 = scmp.ne.s32.totalorder %s71, %s74
      %p80 = scmp.eq.s32.totalorder %s12, 0
      %p81 = por %p79, %p80
      %p82 = scmp.ne.s32.totalorder %s71, %s74
      %p83 = scmp.eq.s32.totalorder %s17, 1
      %p84 = por %p82, %p83
      %p85 = scmp.ne.s32.totalorder %s74, %s75
      %p86 = scmp.eq.s32.totalorder %s17, 0
      %p87 = por %p85, %p86
      %p88 = scmp.ne.s32.totalorder %s74, %s75
      %p89 = scmp.eq.s32.totalorder %s18, 1
      %p90 = por %p88, %p89
      %p92 = scmp.ne.s32.totalorder %s75, %s91
      %p93 = scmp.eq.s32.totalorder %s18, 0
      %p94 = por %p92, %p93
      %s96 = sadd.s32 %s95, 1
      %p99 = scmp.eq.s32.totalorder %s12, 1
      %p100 = scmp.ne.s32.totalorder %s95, %s97
      %p101 = scmp.eq.s32.totalorder %s12, 0
      %p102 = por %p100, %p101
      %p103 = scmp.ne.s32.totalorder %s95, %s97
      %p104 = scmp.eq.s32.totalorder %s17, 1
      %p105 = por %p103, %p104
      %p106 = scmp.ne.s32.totalorder %s97, %s98
      %p107 = scmp.eq.s32.totalorder %s17, 0
      %p108 = por %p106, %p107
      %p109 = scmp.ne.s32.totalorder %s97, %s98
      %p110 = scmp.eq.s32.totalorder %s18, 1
      %p111 = por %p109, %p110
      %p113 = scmp.ne.s32.totalorder %s98, %s112
      %p114 = scmp.eq.s32.totalorder %s18, 0
      %p115 = por %p113, %p114
      %s116 = ssub.s32 %s19, %s38
      %s117 = ssub.s32 %s20, %s34
      %s118 = sor.u32 %s116, %s117
      %p119 = scmp.eq.s32.totalorder %s118, 0
      %s121 = sadd.s32 %s120, 1
      %s122 = scalar_select %p119, %s120, %s121
      %p125 = pneg %p119
      %p126 = scmp.eq.s32.totalorder %s12, 1
      %p127 = por %p125, %p126
      %p128 = scmp.ne.s32.totalorder %s120, %s123
      %p129 = scmp.eq.s32.totalorder %s12, 0
      %p130 = por %p128, %p129
      %p131 = scmp.ne.s32.totalorder %s120, %s123
      %p132 = scmp.eq.s32.totalorder %s17, 1
      %p133 = por %p131, %p132
      %p134 = scmp.ne.s32.totalorder %s123, %s124
      %p135 = scmp.eq.s32.totalorder %s17, 0
      %p136 = por %p134, %p135
      %p137 = scmp.ne.s32.totalorder %s123, %s124
      %p138 = scmp.eq.s32.totalorder %s18, 1
      %p139 = por %p137, %p138
      %p141 = scmp.ne.s32.totalorder %s124, %s140
      %p142 = scmp.eq.s32.totalorder %s18, 0
      %p143 = por %p141, %p142
      %p144 = scmp.le.s32.totalorder 1, %s12
      %p145 = scmp.lt.s32.totalorder %s12, 3
      %p146 = pnand %p144, %p145
      %p147 = pneg %p146
      // Predicated region
      $region9: #{tpu_custom_call.1} parent=5 // pred_check
        _
      $region10: #{tpu_custom_call.1} parent=5 // pred_check_branch
        %149 = sbr.rel (%p146) target = $region12
      $region11: #{tpu_custom_call.1} parent=5 // pred_region
        %s150 = ssub.s32 %s12, 1
        // Predicated region
        $region13: #{tpu_custom_call.1} parent=11 // pred_check
          %p151 = pneg %p57
        $region14: #{tpu_custom_call.1} parent=11 // pred_check_branch
          %153 = sbr.rel (%p151) target = $region16
        $region15: #{tpu_custom_call.1} parent=11 // pred_region
          %p154 = scmp.lt.s32.totalorder %s24, 0
          %s155 = scalar_select %p154, %s24, 0
          %s156 = smul.addr %s155, 8
          %s157 = scalar_lea.vmem %s0, %s156
        $region16: #{tpu_custom_call.1} parent=11 // pred_fallthru
          _
        // Predicated region
        $region17: #{tpu_custom_call.1} parent=11 // pred_check
          %p158 = pneg %p108
        $region18: #{tpu_custom_call.1} parent=11 // pred_check_branch
          %160 = sbr.rel (%p158) target = $region20
        $region19: #{tpu_custom_call.1} parent=11 // pred_region
          _
        $region20: #{tpu_custom_call.1} parent=11 // pred_fallthru
          _
      $region12: #{tpu_custom_call.1} parent=5 // pred_fallthru
        _
      %p161 = scmp.lt.s32.totalorder %s12, 2
      // Predicated region
      $region21: #{tpu_custom_call.1} parent=5 // pred_check
        %p162 = pneg %p161
      $region22: #{tpu_custom_call.1} parent=5 // pred_check_branch
        %164 = sbr.rel (%p162) target = $region24
      $region23: #{tpu_custom_call.1} parent=5 // pred_region
        // Predicated region
        $region25: #{tpu_custom_call.1} parent=23 // pred_check
          %p165 = pneg %p81
        $region26: #{tpu_custom_call.1} parent=23 // pred_check_branch
          %167 = sbr.rel (%p165) target = $region28
        $region27: #{tpu_custom_call.1} parent=23 // pred_region
          %p168 = scmp.lt.s32.totalorder %s21, 0
          %s169 = scalar_select %p168, %s21, 0
          %p170 = scmp.lt.s32.totalorder %s19, 1
          %s171 = scalar_select %p170, %s19, 1
          %p172 = scmp.lt.s32.totalorder %s20, 0
          %s173 = scalar_select %p172, %s20, 0
          %s174 = sadd.s32 %s173, %s171
          %s175 = smul.addr %s169, 2
          %s176 = sadd.s32 %s174, %s175
          %s177 = smul.addr %s176, 4
          %s178 = scalar_lea.vmem %s1, %s177
        $region28: #{tpu_custom_call.1} parent=23 // pred_fallthru
          _
      $region24: #{tpu_custom_call.1} parent=5 // pred_fallthru
        _
      %p179 = scmp.le.s32.totalorder 1, %s12
      %p180 = scmp.lt.s32.totalorder %s12, 3
      %p181 = pnand %p179, %p180
      %p182 = pneg %p181
      // Predicated region
      $region29: #{tpu_custom_call.1} parent=5 // pred_check
        _
      $region30: #{tpu_custom_call.1} parent=5 // pred_check_branch
        %184 = sbr.rel (%p181) target = $region32
      $region31: #{tpu_custom_call.1} parent=5 // pred_region
        %s185 = ssub.s32 %s12, 1
        %p186 = scmp.lt.s32.totalorder %s24, 0
        %s187 = scalar_select %p186, %s24, 0
        %s188 = smul.addr %s187, 8
        %s189 = scalar_lea.vmem %s0, %s188
        %p190 = pneg %p57
        %p191 = pneg %p54
        %p192 = scmp.lt.s32.totalorder %s24, 0
        %s193 = scalar_select %p192, %s24, 0
        %p194 = scmp.lt.s32.totalorder %s22, 1
        %s195 = scalar_select %p194, %s22, 1
        %p196 = scmp.lt.s32.totalorder %s23, 0
        %s197 = scalar_select %p196, %s23, 0
        %s198 = sadd.s32 %s197, %s195
        %s199 = smul.addr %s193, 2
        %s200 = sadd.s32 %s198, %s199
        %s201 = smul.addr %s200, 4
        %s202 = scalar_lea.vmem %s1, %s201
        %p203 = pneg %p87
        %p204 = pneg %p84
        %p205 = pneg %p108
        %p206 = pneg %p105
        %p207 = pneg %p136
        %p208 = pneg %p133
        %s209 = sand.u32 %s123, 1
        %s210 = scalar_lea.sflag [#allocation4], %s209
        %s211 = sand.u32 %s123, 1
        %s212 = smul.addr %s211, 8
        %s213 = scalar_lea.vmem [#allocation3], %s212
        %p214 = scmp.lt.s32.totalorder %s24, 0
        %s215 = scalar_select %p214, %s24, 0
        %s216 = smul.addr %s215, 8
        %s217 = scalar_lea.vmem %s0, %s216
        %p218 = scmp.lt.s32.totalorder %s24, 0
        %s219 = scalar_select %p218, %s24, 0
        %p220 = scmp.lt.s32.totalorder %s22, 1
        %s221 = scalar_select %p220, %s22, 1
        %p222 = scmp.lt.s32.totalorder %s23, 0
        %s223 = scalar_select %p222, %s23, 0
        %s224 = sadd.s32 %s223, %s221
        %s225 = smul.addr %s219, 2
        %s226 = sadd.s32 %s224, %s225
        %s227 = smul.addr %s226, 4
        %s228 = scalar_lea.vmem %s1, %s227
        %p229 = scmp.eq.s32.totalorder %s24, 0
        // Predicated region
        $region33: #{tpu_custom_call.1} parent=31 // pred_check
          %p230 = pneg %p229
        $region34: #{tpu_custom_call.1} parent=31 // pred_check_branch
          %232 = sbr.rel (%p230) target = $region36
        $region35: #{tpu_custom_call.1} parent=31 // pred_region
          %233 = vst [vmem:[#allocation2] sm:$0xff] 0.0
        $region36: #{tpu_custom_call.1} parent=31 // pred_fallthru
          _
        %v234 = vld [vmem:[#allocation2] sm:$0xff]
        %v235 = vld [vmem:[%s217] sm:$0xff]
        %v236 = vld [vmem:[%s228] sm:$0xf]
        %vm237 = vcmask 31744
        %v239 = vsel %vm237, %v235, 0
        %vm241 = vcmask 1043456
        %v243 = vsel %vm241, %v236, 0
        %245 = vmatpush.msra.mxu0 0.0
        %246 = vmatpush.msra.mxu0 0.0
        %247 = vmatpush.msra.mxu0 0.0
        %248 = vmatpush.msra.mxu0 0.0
        %249 = vmatpush.msra.mxu0 0.0
        %250 = vmatpush.msra.mxu0 0.0
        %251 = vmatpush.msra.mxu0 0.0
        %252 = vmatpush.msra.mxu0 0.0
        %253 = vmatpush.msra.mxu0 0.0
        %254 = vmatpush.msra.mxu0 0.0
        %255 = vmatpush.msra.mxu0 0.0
        %256 = vmatpush.msra.mxu0 0.0
        %257 = vmatpush.msra.mxu0 0.0
        %258 = vmatpush.msra.mxu0 0.0
        %259 = vmatpush.msra.mxu0 0.0
        %260 = vmatpush.msra.mxu0 %v243
        %261 = vmatmul.f32.gmra.mxu0 %v239
        %v262 = vpop.f32.mrf.mxu0
        %v263 = vadd.f32 0.0, %v262
        %264 = vdwg.mxu0
        %v265 = vadd.f32 %v234, %v263
        %266 = vst [vmem:[#allocation2] sm:$0xff] %v265
        // Predicated region
        $region37: #{tpu_custom_call.1} parent=31 // pred_check
          %p267 = pneg %p229
        $region38: #{tpu_custom_call.1} parent=31 // pred_check_branch
          %269 = sbr.rel (%p267) target = $region40
        $region39: #{tpu_custom_call.1} parent=31 // pred_region
          %v270 = vld [vmem:[#allocation2] sm:$0xff]
          %v271 = vld [vmem:[%s2] sm:$0xff]
          %273 = vset.pattern.permute.xlu0 0
          %274 = vperm.xlu0 %273, %v271
          %v275 = vpop.permute.xlu0 %274
          %v277 = vadd.f32 %v270, %v275
          %278 = vst [vmem:[%s213] sm:$0xff] %v277
        $region40: #{tpu_custom_call.1} parent=31 // pred_fallthru
          _
        %s279 = sand.u32 %s123, 1
        %s280 = scalar_lea.sflag [#allocation4], %s279
        %s281 = sand.u32 %s123, 1
        %s282 = smul.addr %s281, 8
        %s283 = scalar_lea.vmem [#allocation3], %s282
        // Predicated region
        $region41: #{tpu_custom_call.1} parent=31 // pred_check
          %p284 = pneg %p133
        $region42: #{tpu_custom_call.1} parent=31 // pred_check_branch
          %286 = sbr.rel (%p284) target = $region44
        $region43: #{tpu_custom_call.1} parent=31 // pred_region
          %288 = vsyncadd %s280, 0
          %s289 = sadd.s32 %s23, %s22
          %s290 = smul.addr %s289, 8
          %s291 = scalar_lea.hbm %s3, %s290
          %s293 = sshll.u32 %s283, 4
          %s294 = int_to_ptr.vmem [resolvable:$true] %s293
          %s295 = sshll.u32 %s291, 4
          %s296 = int_to_ptr.hbm [resolvable:$true] %s295
          %298 = dma.vmem_to_hbm [thread:$0]  %s294, 128, %s296, %s280
        $region44: #{tpu_custom_call.1} parent=31 // pred_fallthru
          _
      $region32: #{tpu_custom_call.1} parent=5 // pred_fallthru
        _
      %p299 = scmp.le.s32.totalorder 2, %s12
      // Predicated region
      $region45: #{tpu_custom_call.1} parent=5 // pred_check
        %p300 = pneg %p299
      $region46: #{tpu_custom_call.1} parent=5 // pred_check_branch
        %302 = sbr.rel (%p300) target = $region48
      $region47: #{tpu_custom_call.1} parent=5 // pred_region
        %s303 = ssub.s32 %s12, 2
        // Predicated region
        $region49: #{tpu_custom_call.1} parent=47 // pred_check
          %p304 = pneg %p139
        $region50: #{tpu_custom_call.1} parent=47 // pred_check_branch
          %306 = sbr.rel (%p304) target = $region52
        $region51: #{tpu_custom_call.1} parent=47 // pred_region
          %s307 = sand.u32 %s124, 1
          %s308 = scalar_lea.sflag [#allocation4], %s307
          %s309 = sand.u32 %s124, 1
          %s310 = smul.addr %s309, 8
          %s311 = scalar_lea.vmem [#allocation3], %s310
          %313 = dma.done %s308, 128
        $region52: #{tpu_custom_call.1} parent=47 // pred_fallthru
          _
      $region48: #{tpu_custom_call.1} parent=5 // pred_fallthru
        _
    $region6: #{tpu_custom_call.1} parent=1 // loop_footer
      %s16 = sadd.s32 1, %s12
    $region7: #{tpu_custom_call.1} parent=1 // loop_footer_branch
      %11 = sbr.rel target = $region3
    $region8: #{tpu_custom_call.1} parent=1 // loop_exit
      _
    %314 = vsyncpa [#allocation4], 1
    %s315 = scalar_lea.sflag [#allocation4], 1
    %316 = vsyncpa %s315, 1

</llo_original>
